<compile_context>
chip_gen: v6e
topology: v6e:2x2x1
jax: 0.10.0
libtpu: 0.0.40
codegen_flags: <defaults>
</compile_context>

<pallas_src>
import functools

import jax
import jax.numpy as jnp
import numpy as np
from jax import lax
from jax.experimental import pallas as pl
from jax.experimental.pallas import tpu as pltpu

# MXU operand dtype for the conv matmuls (f32 accumulation either way).
# jnp.bfloat16 gives ~2x MXU throughput on v5e/v6e/v7x but loosens numerics
# vs. the f32 reference; kept at f32 so the 1e-3 check below is comfortable.
MXU_DTYPE = jnp.float32


# ----------------------------------------------------------------------------
# Fused kernel: conv1(3x3, stride s) + BN1 + ReLU + conv2(3x3) + BN2
#               + shortcut (identity or option 'A') + ReLU.
# One group of G images per grid step; activations are lane-dense (G, H, W*C).
# ----------------------------------------------------------------------------
def _basic_block_kernel(*refs, option_a):
    if option_a:
        (xe_ref, xo_ref, bw1_ref, sc1_ref, bi1_ref,
         bw2_ref, sc2_ref, bi2_ref, pmat_ref, out_ref) = refs
    else:
        (x_ref, bw1_ref, sc1_ref, bi1_ref,
         bw2_ref, sc2_ref, bi2_ref, out_ref) = refs

    g, ho, n1 = out_ref.shape          # n1 = Wo * Cout (lane dim)
    m = g * ho                         # matmul M dimension
    mxu = bw1_ref.dtype                # wrapper pre-casts the banded weights

    def _down(v):                      # rows shifted down (zero row at top)
        z = jnp.zeros((v.shape[0], 1, v.shape[2]), v.dtype)
        return jnp.concatenate([z, v[:, :-1, :]], axis=1)

    def _up(v):                        # rows shifted up (zero row at bottom)
        z = jnp.zeros((v.shape[0], 1, v.shape[2]), v.dtype)
        return jnp.concatenate([v[:, 1:, :], z], axis=1)

    # ---- conv1 row operands: input row  s*ho + ky - 1  (zero outside image)
    if option_a:                       # stride 2: even/odd rows arrive pre-split
        xe = xe_ref[...]               # rows 0,2,4,...   (g, ho, K1)
        xo = xo_ref[...]               # rows 1,3,5,...   (g, ho, K1)
        rows1 = (_down(xo), xe, xo)    # ky = 0, 1, 2
        k1 = xe.shape[2]
    else:                              # stride 1
        xv = x_ref[...]
        rows1 = (_down(xv), xv, _up(xv))
        k1 = xv.shape[2]

    # 3x3 conv == 3 banded matmuls with M = g*ho, K = W*Cin, N = Wo*Cout.
    acc = jnp.zeros((m, n1), jnp.float32)
    for ky in range(3):
        acc = acc + jnp.dot(rows1[ky].reshape(m, k1).astype(mxu), bw1_ref[ky],
                            preferred_element_type=jnp.float32)
    out1 = jnp.maximum(acc * sc1_ref[...] + bi1_ref[...], 0.0)   # BN1 + ReLU (f32)

    # ---- conv2 (stride 1) on out1: fully fused, out1 never leaves VMEM/vregs.
    o1 = out1.reshape(g, ho, n1).astype(mxu)
    rows2 = (_down(o1), o1, _up(o1))
    acc2 = jnp.zeros((m, n1), jnp.float32)
    for ky in range(3):
        acc2 = acc2 + jnp.dot(rows2[ky].reshape(m, n1), bw2_ref[ky],
                              preferred_element_type=jnp.float32)
    out2 = acc2 * sc2_ref[...] + bi2_ref[...]                    # BN2 (f32)

    # ---- shortcut (kept in f32) + final ReLU
    if option_a:
        # option 'A': rows ::2 are exactly xe; cols ::2 + channel zero-pad are
        # one 0/1 placement matmul (f32 so the residual is never quantized).
        out2 = out2 + jnp.dot(xe.reshape(m, k1).astype(jnp.float32),
                              pmat_ref[...], preferred_element_type=jnp.float32)
    else:
        out2 = out2 + xv.reshape(m, k1).astype(jnp.float32)

    out_ref[...] = jnp.maximum(out2, 0.0).reshape(g, ho, n1).astype(out_ref.dtype)


# ----------------------------------------------------------------------------
# Constant-matrix builders (wrapper side, tiny).
# ----------------------------------------------------------------------------
def _band_weights(w_hwio, w_in, stride):
    """BW[ky]: (W*Cin, Wo*Cout) block-banded matrix so that a flattened input
    row @ BW[ky] yields the ky-tap contribution of a full flattened output row.
    Column padding (padding=1) and the column stride are folded into the band
    (no column halo => K is an exact multiple of the lane width)."""
    kh, kw, cin, cout = w_hwio.shape
    wo = (w_in - 1) // stride + 1
    sel = np.zeros((kw, w_in, wo), np.float32)
    for kx in range(kw):
        for o in range(wo):
            col = o * stride + kx - 1
            if 0 <= col < w_in:
                sel[kx, col, o] = 1.0
    bw = jnp.einsum("xiw,yxco->yicwo", jnp.asarray(sel), w_hwio)
    return bw.reshape(kh, w_in * cin, wo * cout)


def _option_a_matrix(w_src, cin_src, cout, pad):
    """0/1 placement matrix implementing cols ::2 + channel zero-pad."""
    wo = (w_src + 1) // 2
    p = np.zeros((w_src * cin_src, wo * cout), np.float32)
    for o in range(wo):
        for c in range(cin_src):
            p[(2 * o) * cin_src + c, o * cout + pad + c] = 1.0
    return jnp.asarray(p)


def _pick_group(n, ho, target_m):
    """Largest divisor g of n with g*ho <= target_m, keeping >= 2 grid steps
    when n >= 2 so both v7x TensorCores get work."""
    cap = max(1, target_m // max(ho, 1))
    if n >= 2:
        cap = min(cap, max(n // 2, 1))
    g = 1
    for d in range(1, min(cap, n) + 1):
        if n % d == 0:
            g = d
    return g


# ----------------------------------------------------------------------------
# Parameter init (deterministic, synthetic) + BN folding.
# ----------------------------------------------------------------------------
def _bn_params(key, c):
    ka, kb, kc, kd = jax.random.split(key, 4)
    gamma = 1.0 + 0.1 * jax.random.normal(ka, (c,), jnp.float32)
    beta = 0.1 * jax.random.normal(kb, (c,), jnp.float32)
    mean = 0.1 * jax.random.normal(kc, (c,), jnp.float32)
    var = jnp.abs(jax.random.normal(kd, (c,), jnp.float32)) + 1.0
    return gamma, beta, mean, var


def init_basic_block_params(key, in_planes, planes):
    k1, k2, k3, k4 = jax.random.split(key, 4)
    w1 = 0.1 * jax.random.normal(k1, (3, 3, in_planes, planes), jnp.float32)
    w2 = 0.1 * jax.random.normal(k2, (3, 3, planes, planes), jnp.float32)
    return dict(w1=w1, w2=w2, bn1=_bn_params(k3, planes), bn2=_bn_params(k4, planes))


def _fold_bn(gamma, beta, mean, var, eps=1e-5):
    scale = gamma / jnp.sqrt(var + eps)
    return scale, beta - mean * scale


# ----------------------------------------------------------------------------
# BasicBlock forward (single fused pallas_call). NCHW in / NCHW out.
# ----------------------------------------------------------------------------
def basic_block_forward(x_nchw, params, in_planes, planes, stride=1, target_m=256):
    n, c, h, w = x_nchw.shape
    assert c == in_planes
    assert stride in (1, 2), "resnet20_bireal only uses stride 1 or 2"
    option_a = (stride != 1) or (in_planes != planes)
    if option_a:
        assert stride == 2 and planes == 2 * in_planes and h % 2 == 0, \
            "option-'A' shortcut assumes the standard ResNet downsampling config"

    ho = (h - 1) // stride + 1
    wo = (w - 1) // stride + 1
    n1 = wo * planes

    # Folded BN + banded conv weights (pre-cast to the MXU operand dtype).
    s1, b1 = _fold_bn(*params["bn1"])
    s2, b2 = _fold_bn(*params["bn2"])
    bw1 = _band_weights(params["w1"], w, stride).astype(MXU_DTYPE)
    bw2 = _band_weights(params["w2"], wo, 1).astype(MXU_DTYPE)
    sc1 = jnp.tile(s1, wo)[None, :].astype(jnp.float32)
    bi1 = jnp.tile(b1, wo)[None, :].astype(jnp.float32)
    sc2 = jnp.tile(s2, wo)[None, :].astype(jnp.float32)
    bi2 = jnp.tile(b2, wo)[None, :].astype(jnp.float32)

    # NCHW -> lane-dense (N, H, W*C): layout glue once per block, at entry/exit.
    x_nhwc = jnp.transpose(x_nchw, (0, 2, 3, 1))

    # G images per grid step so each banded matmul has M = g*ho rows.
    g = _pick_group(n, ho, target_m)
    grid = (n // g,)

    const_specs = [
        pl.BlockSpec(bw1.shape, lambda i: (0, 0, 0)),   # resident constants
        pl.BlockSpec(sc1.shape, lambda i: (0, 0)),
        pl.BlockSpec(bi1.shape, lambda i: (0, 0)),
        pl.BlockSpec(bw2.shape, lambda i: (0, 0, 0)),
        pl.BlockSpec(sc2.shape, lambda i: (0, 0)),
        pl.BlockSpec(bi2.shape, lambda i: (0, 0)),
    ]

    if option_a:
        # Pre-split even/odd rows so the stride-2 conv and the ::2-row shortcut
        # need no strided in-kernel reads at all.
        xe = x_nhwc[:, 0::2].reshape(n, ho, w * c)
        xo = x_nhwc[:, 1::2].reshape(n, ho, w * c)
        pmat = _option_a_matrix(w, in_planes, planes, planes // 4)
        inputs = [xe, xo, bw1, sc1, bi1, bw2, sc2, bi2, pmat]
        in_specs = ([pl.BlockSpec((g, ho, w * c), lambda i: (i, 0, 0)),
                     pl.BlockSpec((g, ho, w * c), lambda i: (i, 0, 0))]
                    + const_specs
                    + [pl.BlockSpec(pmat.shape, lambda i: (0, 0))])
    else:
        x_flat = x_nhwc.reshape(n, h, w * c)
        inputs = [x_flat, bw1, sc1, bi1, bw2, sc2, bi2]
        in_specs = ([pl.BlockSpec((g, h, w * c), lambda i: (i, 0, 0))]
                    + const_specs)

    kernel = functools.partial(_basic_block_kernel, option_a=option_a)

    flops = int(2 * n * ho * wo * planes * 9 * (in_planes + planes))
    bytes_accessed = int(4 * (n * h * w * c + n * ho * n1)
                         + bw1.size * bw1.dtype.itemsize
                         + bw2.size * bw2.dtype.itemsize)

    out = pl.pallas_call(
        kernel,
        out_shape=jax.ShapeDtypeStruct((n, ho, n1), x_nchw.dtype),
        grid=grid,
        in_specs=in_specs,
        out_specs=pl.BlockSpec((g, ho, n1), lambda i: (i, 0, 0)),
        compiler_params=pltpu.CompilerParams(
            dimension_semantics=("parallel",),          # batch groups over TCs
            vmem_limit_bytes=32 * 1024 * 1024),         # safe on v5e/v6e/v7x
        cost_estimate=pl.CostEstimate(flops=flops, transcendentals=0,
                                      bytes_accessed=bytes_accessed),
    )(*inputs)

    return jnp.transpose(out.reshape(n, ho, wo, planes), (0, 3, 1, 2))  # -> NCHW


# ----------------------------------------------------------------------------
# Pure-JAX reference (NCHW, lax.conv) for correctness checking.
# ----------------------------------------------------------------------------
def reference_block(x_nchw, params, in_planes, planes, stride=1):
    def conv(x, wgt, s):
        return lax.conv_general_dilated(
            x, wgt, window_strides=(s, s), padding=((1, 1), (1, 1)),
            dimension_numbers=("NCHW", "HWIO", "NCHW"),
            precision=lax.Precision.HIGHEST)

    def bn(x, p):
        sc, bi = _fold_bn(*p)
        return x * sc[None, :, None, None] + bi[None, :, None, None]

    out = jax.nn.relu(bn(conv(x_nchw, params["w1"], stride), params["bn1"]))
    out = bn(conv(out, params["w2"], 1), params["bn2"])
    if stride != 1 or in_planes != planes:
        sc = x_nchw[:, :, ::2, ::2]
        pad = planes // 4
        sc = jnp.pad(sc, ((0, 0), (pad, pad), (0, 0), (0, 0)))
    else:
        sc = x_nchw
    return jax.nn.relu(out + sc)


if __name__ == "__main__":
    key = jax.random.PRNGKey(0)
    kx, kp1, kp2 = jax.random.split(key, 3)

    fwd = jax.jit(basic_block_forward, static_argnums=(2, 3, 4))

    # Case 1: identity shortcut (stride=1, in_planes == planes)
    in_planes, planes, stride = 8, 8, 1
    x = jax.random.normal(kx, (2, in_planes, 16, 16), jnp.float32)
    params = init_basic_block_params(kp1, in_planes, planes)
    y = jax.block_until_ready(fwd(x, params, in_planes, planes, stride))
    y_ref = reference_block(x, params, in_planes, planes, stride)
    assert y.shape == (2, planes, 16, 16)
    # tolerance covers MXU multi-pass f32 vs XLA conv precision differences
    assert np.allclose(np.asarray(y), np.asarray(y_ref), rtol=1e-3, atol=1e-3)

    # Case 2: downsampling block with option 'A' shortcut (stride=2, C doubles)
    in_planes2, planes2, stride2 = 8, 16, 2
    params2 = init_basic_block_params(kp2, in_planes2, planes2)
    y2 = jax.block_until_ready(fwd(x, params2, in_planes2, planes2, stride2))
    y2_ref = reference_block(x, params2, in_planes2, planes2, stride2)
    assert y2.shape == (2, planes2, 8, 8)
    assert np.allclose(np.asarray(y2), np.asarray(y2_ref), rtol=1e-3, atol=1e-3)

    print("KERNEL_OK")
</pallas_src>

<mosaic_0001>
module attributes {stable_mosaic.version = 11 : i64} {
  func.func @_basic_block_kernel(%arg0: i32, %arg1: memref<1x16x128xf32, #tpu.memory_space<vmem>>, %arg2: memref<3x128x128xf32, #tpu.memory_space<vmem>>, %arg3: memref<1x128xf32, #tpu.memory_space<vmem>>, %arg4: memref<1x128xf32, #tpu.memory_space<vmem>>, %arg5: memref<3x128x128xf32, #tpu.memory_space<vmem>>, %arg6: memref<1x128xf32, #tpu.memory_space<vmem>>, %arg7: memref<1x128xf32, #tpu.memory_space<vmem>>, %arg8: memref<1x16x128xf32, #tpu.memory_space<vmem>>) attributes {dimension_semantics = [#tpu.dimension_semantics<parallel>], iteration_bounds = array<i64: 2>, scalar_prefetch = 0 : i64, scratch_operands = 0 : i64, tpu.core_type = #tpu.core_type<tc>, window_params = [{transform_indices = @transform_0, window_bounds = array<i64: 1, 16, 128>}, {pipeline_mode = #tpu.pipeline_mode<synchronous>, transform_indices = @transform_1, window_bounds = array<i64: 3, 128, 128>}, {pipeline_mode = #tpu.pipeline_mode<synchronous>, transform_indices = @transform_2, window_bounds = array<i64: 1, 128>}, {pipeline_mode = #tpu.pipeline_mode<synchronous>, transform_indices = @transform_3, window_bounds = array<i64: 1, 128>}, {pipeline_mode = #tpu.pipeline_mode<synchronous>, transform_indices = @transform_4, window_bounds = array<i64: 3, 128, 128>}, {pipeline_mode = #tpu.pipeline_mode<synchronous>, transform_indices = @transform_5, window_bounds = array<i64: 1, 128>}, {pipeline_mode = #tpu.pipeline_mode<synchronous>, transform_indices = @transform_6, window_bounds = array<i64: 1, 128>}, {transform_indices = @transform_7, window_bounds = array<i64: 1, 16, 128>}]} {
    %c0 = arith.constant 0 : index
    %c0_0 = arith.constant 0 : index
    %c0_1 = arith.constant 0 : index
    %0 = vector.load %arg1[%c0, %c0_0, %c0_1] : memref<1x16x128xf32, #tpu.memory_space<vmem>>, vector<1x16x128xf32>
    %cst = arith.constant 0.000000e+00 : f32
    %1 = vector.broadcast %cst : f32 to vector<1x1x128xf32>
    %2 = vector.extract_strided_slice %0 {offsets = [0, 0, 0], sizes = [1, 15, 128], strides = [1, 1, 1]} : vector<1x16x128xf32> to vector<1x15x128xf32>
    %3 = tpu.concatenate %1, %2 in 1 : vector<1x1x128xf32>, vector<1x15x128xf32> -> vector<1x16x128xf32>
    %cst_2 = arith.constant 0.000000e+00 : f32
    %4 = vector.broadcast %cst_2 : f32 to vector<1x1x128xf32>
    %5 = vector.extract_strided_slice %0 {offsets = [0, 1, 0], sizes = [1, 15, 128], strides = [1, 1, 1]} : vector<1x16x128xf32> to vector<1x15x128xf32>
    %6 = tpu.concatenate %5, %4 in 1 : vector<1x15x128xf32>, vector<1x1x128xf32> -> vector<1x16x128xf32>
    %cst_3 = arith.constant 0.000000e+00 : f32
    %7 = vector.broadcast %cst_3 : f32 to vector<16x128xf32>
    %8 = vector.shape_cast %3 : vector<1x16x128xf32> to vector<16x128xf32>
    %c0_4 = arith.constant 0 : index
    %c0_5 = arith.constant 0 : index
    %c0_6 = arith.constant 0 : index
    %9 = vector.load %arg2[%c0_4, %c0_5, %c0_6] : memref<3x128x128xf32, #tpu.memory_space<vmem>>, vector<1x128x128xf32>
    %10 = vector.shape_cast %9 : vector<1x128x128xf32> to vector<128x128xf32>
    %cst_7 = arith.constant dense<0.000000e+00> : vector<16x128xf32>
    %11 = tpu.matmul %8, %10, %cst_7 {dimension_numbers = #tpu.dot_dimension_numbers<[1], [0], [0], [1], [0, 0, 1, 1], [], []>} : vector<16x128xf32>, vector<128x128xf32>, vector<16x128xf32> -> vector<16x128xf32>
    %12 = arith.addf %7, %11 : vector<16x128xf32>
    %13 = vector.shape_cast %0 : vector<1x16x128xf32> to vector<16x128xf32>
    %c1 = arith.constant 1 : index
    %c0_8 = arith.constant 0 : index
    %c0_9 = arith.constant 0 : index
    %14 = vector.load %arg2[%c1, %c0_8, %c0_9] : memref<3x128x128xf32, #tpu.memory_space<vmem>>, vector<1x128x128xf32>
    %15 = vector.shape_cast %14 : vector<1x128x128xf32> to vector<128x128xf32>
    %cst_10 = arith.constant dense<0.000000e+00> : vector<16x128xf32>
    %16 = tpu.matmul %13, %15, %cst_10 {dimension_numbers = #tpu.dot_dimension_numbers<[1], [0], [0], [1], [0, 0, 1, 1], [], []>} : vector<16x128xf32>, vector<128x128xf32>, vector<16x128xf32> -> vector<16x128xf32>
    %17 = arith.addf %12, %16 : vector<16x128xf32>
    %18 = vector.shape_cast %6 : vector<1x16x128xf32> to vector<16x128xf32>
    %c2 = arith.constant 2 : index
    %c0_11 = arith.constant 0 : index
    %c0_12 = arith.constant 0 : index
    %19 = vector.load %arg2[%c2, %c0_11, %c0_12] : memref<3x128x128xf32, #tpu.memory_space<vmem>>, vector<1x128x128xf32>
    %20 = vector.shape_cast %19 : vector<1x128x128xf32> to vector<128x128xf32>
    %cst_13 = arith.constant dense<0.000000e+00> : vector<16x128xf32>
    %21 = tpu.matmul %18, %20, %cst_13 {dimension_numbers = #tpu.dot_dimension_numbers<[1], [0], [0], [1], [0, 0, 1, 1], [], []>} : vector<16x128xf32>, vector<128x128xf32>, vector<16x128xf32> -> vector<16x128xf32>
    %22 = arith.addf %17, %21 : vector<16x128xf32>
    %c0_14 = arith.constant 0 : index
    %c0_15 = arith.constant 0 : index
    %23 = vector.load %arg3[%c0_14, %c0_15] : memref<1x128xf32, #tpu.memory_space<vmem>>, vector<1x128xf32>
    %24 = vector.broadcast %23 : vector<1x128xf32> to vector<16x128xf32>
    %25 = arith.mulf %22, %24 : vector<16x128xf32>
    %c0_16 = arith.constant 0 : index
    %c0_17 = arith.constant 0 : index
    %26 = vector.load %arg4[%c0_16, %c0_17] : memref<1x128xf32, #tpu.memory_space<vmem>>, vector<1x128xf32>
    %27 = vector.broadcast %26 : vector<1x128xf32> to vector<16x128xf32>
    %28 = arith.addf %25, %27 : vector<16x128xf32>
    %cst_18 = arith.constant 0.000000e+00 : f32
    %29 = vector.broadcast %cst_18 : f32 to vector<16x128xf32>
    %30 = arith.maximumf %28, %29 : vector<16x128xf32>
    %31 = vector.shape_cast %30 : vector<16x128xf32> to vector<1x16x128xf32>
    %cst_19 = arith.constant 0.000000e+00 : f32
    %32 = vector.broadcast %cst_19 : f32 to vector<1x1x128xf32>
    %33 = vector.extract_strided_slice %31 {offsets = [0, 0, 0], sizes = [1, 15, 128], strides = [1, 1, 1]} : vector<1x16x128xf32> to vector<1x15x128xf32>
    %34 = tpu.concatenate %32, %33 in 1 : vector<1x1x128xf32>, vector<1x15x128xf32> -> vector<1x16x128xf32>
    %cst_20 = arith.constant 0.000000e+00 : f32
    %35 = vector.broadcast %cst_20 : f32 to vector<1x1x128xf32>
    %36 = vector.extract_strided_slice %31 {offsets = [0, 1, 0], sizes = [1, 15, 128], strides = [1, 1, 1]} : vector<1x16x128xf32> to vector<1x15x128xf32>
    %37 = tpu.concatenate %36, %35 in 1 : vector<1x15x128xf32>, vector<1x1x128xf32> -> vector<1x16x128xf32>
    %cst_21 = arith.constant 0.000000e+00 : f32
    %38 = vector.broadcast %cst_21 : f32 to vector<16x128xf32>
    %39 = vector.shape_cast %34 : vector<1x16x128xf32> to vector<16x128xf32>
    %c0_22 = arith.constant 0 : index
    %c0_23 = arith.constant 0 : index
    %c0_24 = arith.constant 0 : index
    %40 = vector.load %arg5[%c0_22, %c0_23, %c0_24] : memref<3x128x128xf32, #tpu.memory_space<vmem>>, vector<1x128x128xf32>
    %41 = vector.shape_cast %40 : vector<1x128x128xf32> to vector<128x128xf32>
    %cst_25 = arith.constant dense<0.000000e+00> : vector<16x128xf32>
    %42 = tpu.matmul %39, %41, %cst_25 {dimension_numbers = #tpu.dot_dimension_numbers<[1], [0], [0], [1], [0, 0, 1, 1], [], []>} : vector<16x128xf32>, vector<128x128xf32>, vector<16x128xf32> -> vector<16x128xf32>
    %43 = arith.addf %38, %42 : vector<16x128xf32>
    %44 = vector.shape_cast %31 : vector<1x16x128xf32> to vector<16x128xf32>
    %c1_26 = arith.constant 1 : index
    %c0_27 = arith.constant 0 : index
    %c0_28 = arith.constant 0 : index
    %45 = vector.load %arg5[%c1_26, %c0_27, %c0_28] : memref<3x128x128xf32, #tpu.memory_space<vmem>>, vector<1x128x128xf32>
    %46 = vector.shape_cast %45 : vector<1x128x128xf32> to vector<128x128xf32>
    %cst_29 = arith.constant dense<0.000000e+00> : vector<16x128xf32>
    %47 = tpu.matmul %44, %46, %cst_29 {dimension_numbers = #tpu.dot_dimension_numbers<[1], [0], [0], [1], [0, 0, 1, 1], [], []>} : vector<16x128xf32>, vector<128x128xf32>, vector<16x128xf32> -> vector<16x128xf32>
    %48 = arith.addf %43, %47 : vector<16x128xf32>
    %49 = vector.shape_cast %37 : vector<1x16x128xf32> to vector<16x128xf32>
    %c2_30 = arith.constant 2 : index
    %c0_31 = arith.constant 0 : index
    %c0_32 = arith.constant 0 : index
    %50 = vector.load %arg5[%c2_30, %c0_31, %c0_32] : memref<3x128x128xf32, #tpu.memory_space<vmem>>, vector<1x128x128xf32>
    %51 = vector.shape_cast %50 : vector<1x128x128xf32> to vector<128x128xf32>
    %cst_33 = arith.constant dense<0.000000e+00> : vector<16x128xf32>
    %52 = tpu.matmul %49, %51, %cst_33 {dimension_numbers = #tpu.dot_dimension_numbers<[1], [0], [0], [1], [0, 0, 1, 1], [], []>} : vector<16x128xf32>, vector<128x128xf32>, vector<16x128xf32> -> vector<16x128xf32>
    %53 = arith.addf %48, %52 : vector<16x128xf32>
    %c0_34 = arith.constant 0 : index
    %c0_35 = arith.constant 0 : index
    %54 = vector.load %arg6[%c0_34, %c0_35] : memref<1x128xf32, #tpu.memory_space<vmem>>, vector<1x128xf32>
    %55 = vector.broadcast %54 : vector<1x128xf32> to vector<16x128xf32>
    %56 = arith.mulf %53, %55 : vector<16x128xf32>
    %c0_36 = arith.constant 0 : index
    %c0_37 = arith.constant 0 : index
    %57 = vector.load %arg7[%c0_36, %c0_37] : memref<1x128xf32, #tpu.memory_space<vmem>>, vector<1x128xf32>
    %58 = vector.broadcast %57 : vector<1x128xf32> to vector<16x128xf32>
    %59 = arith.addf %56, %58 : vector<16x128xf32>
    %60 = vector.shape_cast %0 : vector<1x16x128xf32> to vector<16x128xf32>
    %61 = arith.addf %59, %60 : vector<16x128xf32>
    %cst_38 = arith.constant 0.000000e+00 : f32
    %62 = vector.broadcast %cst_38 : f32 to vector<16x128xf32>
    %63 = arith.maximumf %61, %62 : vector<16x128xf32>
    %64 = vector.shape_cast %63 : vector<16x128xf32> to vector<1x16x128xf32>
    %c0_39 = arith.constant 0 : index
    %c0_40 = arith.constant 0 : index
    %c0_41 = arith.constant 0 : index
    %65 = vector.load %arg8[%c0_39, %c0_40, %c0_41] : memref<1x16x128xf32, #tpu.memory_space<vmem>>, vector<1x16x128xf32>
    tpu.vector_store %arg8[%c0_39, %c0_40, %c0_41], %64 {strides = array<i32>} : memref<1x16x128xf32, #tpu.memory_space<vmem>>, vector<1x16x128xf32>,
    return
  }
  func.func @transform_0(%arg0: i32) -> (i32, i32, i32) {
    %c0_i32 = arith.constant 0 : i32
    %c0_i32_0 = arith.constant 0 : i32
    %c0_i32_1 = arith.constant 0 : i32
    return %arg0, %c0_i32, %c0_i32_0 : i32, i32, i32
  }
  func.func @transform_1(%arg0: i32) -> (i32, i32, i32) {
    %c0_i32 = arith.constant 0 : i32
    %c0_i32_0 = arith.constant 0 : i32
    %c0_i32_1 = arith.constant 0 : i32
    %c0_i32_2 = arith.constant 0 : i32
    return %c0_i32, %c0_i32_0, %c0_i32_1 : i32, i32, i32
  }
  func.func @transform_2(%arg0: i32) -> (i32, i32) {
    %c0_i32 = arith.constant 0 : i32
    %c0_i32_0 = arith.constant 0 : i32
    %c0_i32_1 = arith.constant 0 : i32
    return %c0_i32, %c0_i32_0 : i32, i32
  }
  func.func @transform_3(%arg0: i32) -> (i32, i32) {
    %c0_i32 = arith.constant 0 : i32
    %c0_i32_0 = arith.constant 0 : i32
    %c0_i32_1 = arith.constant 0 : i32
    return %c0_i32, %c0_i32_0 : i32, i32
  }
  func.func @transform_4(%arg0: i32) -> (i32, i32, i32) {
    %c0_i32 = arith.constant 0 : i32
    %c0_i32_0 = arith.constant 0 : i32
    %c0_i32_1 = arith.constant 0 : i32
    %c0_i32_2 = arith.constant 0 : i32
    return %c0_i32, %c0_i32_0, %c0_i32_1 : i32, i32, i32
  }
  func.func @transform_5(%arg0: i32) -> (i32, i32) {
    %c0_i32 = arith.constant 0 : i32
    %c0_i32_0 = arith.constant 0 : i32
    %c0_i32_1 = arith.constant 0 : i32
    return %c0_i32, %c0_i32_0 : i32, i32
  }
  func.func @transform_6(%arg0: i32) -> (i32, i32) {
    %c0_i32 = arith.constant 0 : i32
    %c0_i32_0 = arith.constant 0 : i32
    %c0_i32_1 = arith.constant 0 : i32
    return %c0_i32, %c0_i32_0 : i32, i32
  }
  func.func @transform_7(%arg0: i32) -> (i32, i32, i32) {
    %c0_i32 = arith.constant 0 : i32
    %c0_i32_0 = arith.constant 0 : i32
    %c0_i32_1 = arith.constant 0 : i32
    return %arg0, %c0_i32, %c0_i32_0 : i32, i32, i32
  }
}

</mosaic_0001>

<llo_original>
// kernel: tile.23
$region0: #{tile.23}
  #allocation0 [shape = 's32[1]{0}', space=sflag, size = 0x4, scoped, tag = 'scoped memory for tile.23']
  %s0 = inlined_call_operand.vmem [shape: f32[8], index: 0, kind: input, shape index: {}]
  %s1 = inlined_call_operand.vmem [shape: f32[16,8], index: 1, kind: output, shape index: {}]
  // Predicated region
  $region2: #{tile.23} parent=0 // pred_check
    _
  $region3: #{tile.23} parent=0 // pred_check_branch
    %3 = sbr.rel (0) target = $region5
  $region4: #{tile.23} parent=0 // pred_region
    _
  $region5: #{tile.23} parent=0 // pred_fallthru
    _
  %v4 = vld [vmem:[%s0] ss:$0 sm:$0xff]
  %5 = vst [vmem:[%s1] sm:$0xff] %v4
  %s6 = scalar_lea.vmem %s1, 8
  %7 = vst [vmem:[%s6] sm:$0xff] %v4

// kernel: tile.24
$region0: #{tile.24}
  %s0 = inlined_call_operand.vmem [shape: f32[16,8], index: 0, kind: input, shape index: {}]
  %s1 = inlined_call_operand.vmem [shape: f32[1,128], index: 1, kind: output, shape index: {}]
  $region1: #{tile.24} parent=0
    #allocation0 [shape = 'u8[4096]{0}', space=vmem, size = 0x1000, scoped, tag = 'scoped mem for output reshape']
    %v2 = vld [vmem:[%s0] sm:$0x1]
    %vm3 = vcmask 64512
    %4 = vst.msk [vmem:[#allocation0] sm:$0x1] %vm3, %v2
    %s5 = scalar_lea.vmem %s0, 15
    %v6 = vld [vmem:[%s5] sm:$0x1]
    %7 = vrot.lane.b32.xlu0 %v6, 120
    %v8 = vpop.permute.xlu0 %7
    %vm9 = vcmask 1048512
    %10 = vst.msk [vmem:[#allocation0] sm:$0x1] %vm9, %v8
    %s11 = scalar_lea.vmem %s0, 14
    %v12 = vld [vmem:[%s11] sm:$0x1]
    %13 = vrot.lane.b32.xlu0 %v12, 112
    %v14 = vpop.permute.xlu0 %13
    %vm15 = vcmask 982912
    %16 = vst.msk [vmem:[#allocation0] sm:$0x1] %vm15, %v14
    %s17 = scalar_lea.vmem %s0, 13
    %v18 = vld [vmem:[%s17] sm:$0x1]
    %19 = vrot.lane.b32.xlu0 %v18, 104
    %v20 = vpop.permute.xlu0 %19
    %vm21 = vcmask 917312
    %22 = vst.msk [vmem:[#allocation0] sm:$0x1] %vm21, %v20
    %s23 = scalar_lea.vmem %s0, 12
    %v24 = vld [vmem:[%s23] sm:$0x1]
    %25 = vrot.lane.b32.xlu0 %v24, 96
    %v26 = vpop.permute.xlu0 %25
    %vm27 = vcmask 851712
    %28 = vst.msk [vmem:[#allocation0] sm:$0x1] %vm27, %v26
    %s29 = scalar_lea.vmem %s0, 11
    %v30 = vld [vmem:[%s29] sm:$0x1]
    %31 = vrot.lane.b32.xlu0 %v30, 88
    %v32 = vpop.permute.xlu0 %31
    %vm33 = vcmask 786112
    %34 = vst.msk [vmem:[#allocation0] sm:$0x1] %vm33, %v32
    %s35 = scalar_lea.vmem %s0, 10
    %v36 = vld [vmem:[%s35] sm:$0x1]
    %37 = vrot.lane.b32.xlu0 %v36, 80
    %v38 = vpop.permute.xlu0 %37
    %vm39 = vcmask 720512
    %40 = vst.msk [vmem:[#allocation0] sm:$0x1] %vm39, %v38
    %s41 = scalar_lea.vmem %s0, 9
    %v42 = vld [vmem:[%s41] sm:$0x1]
    %43 = vrot.lane.b32.xlu0 %v42, 72
    %v44 = vpop.permute.xlu0 %43
    %vm45 = vcmask 654912
    %46 = vst.msk [vmem:[#allocation0] sm:$0x1] %vm45, %v44
    %s47 = scalar_lea.vmem %s0, 8
    %v48 = vld [vmem:[%s47] sm:$0x1]
    %49 = vrot.lane.b32.xlu0 %v48, 64
    %v50 = vpop.permute.xlu0 %49
    %vm51 = vcmask 589312
    %52 = vst.msk [vmem:[#allocation0] sm:$0x1] %vm51, %v50
    %s53 = scalar_lea.vmem %s0, 7
    %v54 = vld [vmem:[%s53] sm:$0x1]
    %55 = vrot.lane.b32.xlu0 %v54, 56
    %v56 = vpop.permute.xlu0 %55
    %vm57 = vcmask 523712
    %58 = vst.msk [vmem:[#allocation0] sm:$0x1] %vm57, %v56
    %s59 = scalar_lea.vmem %s0, 6
    %v60 = vld [vmem:[%s59] sm:$0x1]
    %61 = vrot.lane.b32.xlu0 %v60, 48
    %v62 = vpop.permute.xlu0 %61
    %vm63 = vcmask 458112
    %64 = vst.msk [vmem:[#allocation0] sm:$0x1] %vm63, %v62
    %s65 = scalar_lea.vmem %s0, 5
    %v66 = vld [vmem:[%s65] sm:$0x1]
    %67 = vrot.lane.b32.xlu0 %v66, 40
    %v68 = vpop.permute.xlu0 %67
    %vm69 = vcmask 392512
    %70 = vst.msk [vmem:[#allocation0] sm:$0x1] %vm69, %v68
    %s71 = scalar_lea.vmem %s0, 4
    %v72 = vld [vmem:[%s71] sm:$0x1]
    %73 = vrot.lane.b32.xlu0 %v72, 32
    %v74 = vpop.permute.xlu0 %73
    %vm75 = vcmask 326912
    %76 = vst.msk [vmem:[#allocation0] sm:$0x1] %vm75, %v74
    %s77 = scalar_lea.vmem %s0, 3
    %v78 = vld [vmem:[%s77] sm:$0x1]
    %79 = vrot.lane.b32.xlu0 %v78, 24
    %v80 = vpop.permute.xlu0 %79
    %vm81 = vcmask 261312
    %82 = vst.msk [vmem:[#allocation0] sm:$0x1] %vm81, %v80
    %s83 = scalar_lea.vmem %s0, 2
    %v84 = vld [vmem:[%s83] sm:$0x1]
    %85 = vrot.lane.b32.xlu0 %v84, 16
    %v86 = vpop.permute.xlu0 %85
    %vm87 = vcmask 195712
    %88 = vst.msk [vmem:[#allocation0] sm:$0x1] %vm87, %v86
    %s89 = scalar_lea.vmem %s0, 1
    %v90 = vld [vmem:[%s89] sm:$0x1]
    %91 = vrot.lane.b32.xlu0 %v90, 8
    %v92 = vpop.permute.xlu0 %91
    %vm93 = vcmask 130112
    %94 = vst.msk [vmem:[#allocation0] sm:$0x1] %vm93, %v92
    %s96 = sshll.u32 1, 1
    %s97 = ssub.s32 %s96, 1
    %v99 = vld [vmem:[#allocation0] sm:%s97]
    %s100 = sshll.u32 1, 1
    %s101 = ssub.s32 %s100, 1
    %102 = vst [vmem:[%s1] sm:%s101] %v99

// kernel: basic_block_forward.1
$region0: #{basic_block_forward.1}
  #allocation0 [shape = 'u32[]', space=smem, size = 0x4, offset = 0x4, fixed_abs, tag = 'smem constant byte address 0x4 - core index']
  #allocation1 [shape = 'u32[144,128]{1,0:T(1,128)}', space=vmem, size = 0x12000, scoped, tag = 'internal scratch']
  %s0 = inlined_call_operand.vmem [shape: f32[2,16,128], index: 0, kind: input, shape index: {}]
  %s1 = inlined_call_operand.vmem [shape: f32[3,128,128], index: 1, kind: input, shape index: {}]
  %s2 = inlined_call_operand.vmem [shape: f32[1,128], index: 2, kind: input, shape index: {}]
  %s3 = inlined_call_operand.vmem [shape: f32[1,128], index: 3, kind: input, shape index: {}]
  %s4 = inlined_call_operand.vmem [shape: f32[3,128,128], index: 4, kind: input, shape index: {}]
  %s5 = inlined_call_operand.vmem [shape: f32[1,128], index: 5, kind: input, shape index: {}]
  %s6 = inlined_call_operand.vmem [shape: f32[1,128], index: 6, kind: input, shape index: {}]
  %s7 = inlined_call_operand.vmem [shape: f32[2,16,128], index: 7, kind: output, shape index: {}]
  %s8 = sld [smem:[#allocation0]]
  $region61: #{basic_block_forward.1} parent=0
    _
  %s10 = ssub.s32 1, %s8
  %s11 = scalar_select 0, %s10, %s8
  loop: start=0, step=1, limit=4
  $region2: #{basic_block_forward.1} parent=0 // loop_pre_header
    _
  $region3: #{basic_block_forward.1} parent=0 // loop_header
    %s13 = sphi 0, %s17
    %p14 = scmp.ge.s32.totalorder %s13, 4
    %s23 = sphi 0, %s25
    %s26 = sphi 0, %s23
    %s27 = sphi 0, %s26
    %s43 = sphi 0, %s27
    %s47 = sphi 0, %s47
    %s49 = sphi 0, %s47
    %s50 = sphi 0, %s49
    %s64 = sphi 0, %s50
    %s68 = sphi 0, %s68
    %s70 = sphi 0, %s68
    %s71 = sphi 0, %s70
    %s85 = sphi 0, %s71
    %s89 = sphi 0, %s89
    %s91 = sphi 0, %s89
    %s92 = sphi 0, %s91
    %s106 = sphi 0, %s92
    %s110 = sphi 0, %s110
    %s112 = sphi 0, %s110
    %s113 = sphi 0, %s112
    %s127 = sphi 0, %s113
    %s131 = sphi 0, %s131
    %s133 = sphi 0, %s131
    %s134 = sphi 0, %s133
    %s148 = sphi 0, %s134
    %s152 = sphi 0, %s152
    %s154 = sphi 0, %s152
    %s155 = sphi 0, %s154
    %s169 = sphi 0, %s155
    %s175 = sphi 0, %s177
    %s178 = sphi 0, %s175
    %s179 = sphi 0, %s178
    %s195 = sphi 0, %s179
  $region4: #{basic_block_forward.1} parent=0 // loop_header_branch
    %16 = sbr.rel (%p14) target = $region8
  $region5: #{basic_block_forward.1} parent=0 // loop_body
    %s18 = ssub.s32 %s13, 1
    %s19 = ssub.s32 %s13, 2
    %s20 = sadd.s32 %s13, 1
    %s21 = ssub.s32 %s13, %s20
    %p22 = scmp.eq.s32.totalorder %s21, 0
    %s24 = sadd.s32 %s23, 1
    %s25 = scalar_select %p22, %s23, %s24
    %p28 = pneg %p22
    %p29 = scmp.eq.s32.totalorder %s13, 1
    %p30 = por %p28, %p29
    %p31 = scmp.ne.s32.totalorder %s23, %s26
    %p32 = scmp.eq.s32.totalorder %s13, 0
    %p33 = por %p31, %p32
    %p34 = scmp.ne.s32.totalorder %s23, %s26
    %p35 = scmp.eq.s32.totalorder %s18, 1
    %p36 = por %p34, %p35
    %p37 = scmp.ne.s32.totalorder %s26, %s27
    %p38 = scmp.eq.s32.totalorder %s18, 0
    %p39 = por %p37, %p38
    %p40 = scmp.ne.s32.totalorder %s26, %s27
    %p41 = scmp.eq.s32.totalorder %s19, 1
    %p42 = por %p40, %p41
    %p44 = scmp.ne.s32.totalorder %s27, %s43
    %p45 = scmp.eq.s32.totalorder %s19, 0
    %p46 = por %p44, %p45
    %s48 = sadd.s32 %s47, 1
    %p51 = scmp.eq.s32.totalorder %s13, 1
    %p52 = scmp.ne.s32.totalorder %s47, %s49
    %p53 = scmp.eq.s32.totalorder %s13, 0
    %p54 = por %p52, %p53
    %p55 = scmp.ne.s32.totalorder %s47, %s49
    %p56 = scmp.eq.s32.totalorder %s18, 1
    %p57 = por %p55, %p56
    %p58 = scmp.ne.s32.totalorder %s49, %s50
    %p59 = scmp.eq.s32.totalorder %s18, 0
    %p60 = por %p58, %p59
    %p61 = scmp.ne.s32.totalorder %s49, %s50
    %p62 = scmp.eq.s32.totalorder %s19, 1
    %p63 = por %p61, %p62
    %p65 = scmp.ne.s32.totalorder %s50, %s64
    %p66 = scmp.eq.s32.totalorder %s19, 0
    %p67 = por %p65, %p66
    %s69 = sadd.s32 %s68, 1
    %p72 = scmp.eq.s32.totalorder %s13, 1
    %p73 = scmp.ne.s32.totalorder %s68, %s70
    %p74 = scmp.eq.s32.totalorder %s13, 0
    %p75 = por %p73, %p74
    %p76 = scmp.ne.s32.totalorder %s68, %s70
    %p77 = scmp.eq.s32.totalorder %s18, 1
    %p78 = por %p76, %p77
    %p79 = scmp.ne.s32.totalorder %s70, %s71
    %p80 = scmp.eq.s32.totalorder %s18, 0
    %p81 = por %p79, %p80
    %p82 = scmp.ne.s32.totalorder %s70, %s71
    %p83 = scmp.eq.s32.totalorder %s19, 1
    %p84 = por %p82, %p83
    %p86 = scmp.ne.s32.totalorder %s71, %s85
    %p87 = scmp.eq.s32.totalorder %s19, 0
    %p88 = por %p86, %p87
    %s90 = sadd.s32 %s89, 1
    %p93 = scmp.eq.s32.totalorder %s13, 1
    %p94 = scmp.ne.s32.totalorder %s89, %s91
    %p95 = scmp.eq.s32.totalorder %s13, 0
    %p96 = por %p94, %p95
    %p97 = scmp.ne.s32.totalorder %s89, %s91
    %p98 = scmp.eq.s32.totalorder %s18, 1
    %p99 = por %p97, %p98
    %p100 = scmp.ne.s32.totalorder %s91, %s92
    %p101 = scmp.eq.s32.totalorder %s18, 0
    %p102 = por %p100, %p101
    %p103 = scmp.ne.s32.totalorder %s91, %s92
    %p104 = scmp.eq.s32.totalorder %s19, 1
    %p105 = por %p103, %p104
    %p107 = scmp.ne.s32.totalorder %s92, %s106
    %p108 = scmp.eq.s32.totalorder %s19, 0
    %p109 = por %p107, %p108
    %s111 = sadd.s32 %s110, 1
    %p114 = scmp.eq.s32.totalorder %s13, 1
    %p115 = scmp.ne.s32.totalorder %s110, %s112
    %p116 = scmp.eq.s32.totalorder %s13, 0
    %p117 = por %p115, %p116
    %p118 = scmp.ne.s32.totalorder %s110, %s112
    %p119 = scmp.eq.s32.totalorder %s18, 1
    %p120 = por %p118, %p119
    %p121 = scmp.ne.s32.totalorder %s112, %s113
    %p122 = scmp.eq.s32.totalorder %s18, 0
    %p123 = por %p121, %p122
    %p124 = scmp.ne.s32.totalorder %s112, %s113
    %p125 = scmp.eq.s32.totalorder %s19, 1
    %p126 = por %p124, %p125
    %p128 = scmp.ne.s32.totalorder %s113, %s127
    %p129 = scmp.eq.s32.totalorder %s19, 0
    %p130 = por %p128, %p129
    %s132 = sadd.s32 %s131, 1
    %p135 = scmp.eq.s32.totalorder %s13, 1
    %p136 = scmp.ne.s32.totalorder %s131, %s133
    %p137 = scmp.eq.s32.totalorder %s13, 0
    %p138 = por %p136, %p137
    %p139 = scmp.ne.s32.totalorder %s131, %s133
    %p140 = scmp.eq.s32.totalorder %s18, 1
    %p141 = por %p139, %p140
    %p142 = scmp.ne.s32.totalorder %s133, %s134
    %p143 = scmp.eq.s32.totalorder %s18, 0
    %p144 = por %p142, %p143
    %p145 = scmp.ne.s32.totalorder %s133, %s134
    %p146 = scmp.eq.s32.totalorder %s19, 1
    %p147 = por %p145, %p146
    %p149 = scmp.ne.s32.totalorder %s134, %s148
    %p150 = scmp.eq.s32.totalorder %s19, 0
    %p151 = por %p149, %p150
    %s153 = sadd.s32 %s152, 1
    %p156 = scmp.eq.s32.totalorder %s13, 1
    %p157 = scmp.ne.s32.totalorder %s152, %s154
    %p158 = scmp.eq.s32.totalorder %s13, 0
    %p159 = por %p157, %p158
    %p160 = scmp.ne.s32.totalorder %s152, %s154
    %p161 = scmp.eq.s32.totalorder %s18, 1
    %p162 = por %p160, %p161
    %p163 = scmp.ne.s32.totalorder %s154, %s155
    %p164 = scmp.eq.s32.totalorder %s18, 0
    %p165 = por %p163, %p164
    %p166 = scmp.ne.s32.totalorder %s154, %s155
    %p167 = scmp.eq.s32.totalorder %s19, 1
    %p168 = por %p166, %p167
    %p170 = scmp.ne.s32.totalorder %s155, %s169
    %p171 = scmp.eq.s32.totalorder %s19, 0
    %p172 = por %p170, %p171
    %s173 = ssub.s32 %s13, %s20
    %p174 = scmp.eq.s32.totalorder %s173, 0
    %s176 = sadd.s32 %s175, 1
    %s177 = scalar_select %p174, %s175, %s176
    %p180 = pneg %p174
    %p181 = scmp.eq.s32.totalorder %s13, 1
    %p182 = por %p180, %p181
    %p183 = scmp.ne.s32.totalorder %s175, %s178
    %p184 = scmp.eq.s32.totalorder %s13, 0
    %p185 = por %p183, %p184
    %p186 = scmp.ne.s32.totalorder %s175, %s178
    %p187 = scmp.eq.s32.totalorder %s18, 1
    %p188 = por %p186, %p187
    %p189 = scmp.ne.s32.totalorder %s178, %s179
    %p190 = scmp.eq.s32.totalorder %s18, 0
    %p191 = por %p189, %p190
    %p192 = scmp.ne.s32.totalorder %s178, %s179
    %p193 = scmp.eq.s32.totalorder %s19, 1
    %p194 = por %p192, %p193
    %p196 = scmp.ne.s32.totalorder %s179, %s195
    %p197 = scmp.eq.s32.totalorder %s19, 0
    %p198 = por %p196, %p197
    %p199 = scmp.le.s32.totalorder 1, %s13
    %p200 = scmp.lt.s32.totalorder %s13, 3
    %p201 = pnand %p199, %p200
    %p202 = pneg %p201
    // Predicated region
    $region9: #{basic_block_forward.1} parent=5 // pred_check
      _
    $region10: #{basic_block_forward.1} parent=5 // pred_check_branch
      %204 = sbr.rel (%p201) target = $region12
    $region11: #{basic_block_forward.1} parent=5 // pred_region
      %s205 = ssub.s32 %s13, 1
      // Predicated region
      $region13: #{basic_block_forward.1} parent=11 // pred_check
        %p206 = pneg %p60
      $region14: #{basic_block_forward.1} parent=11 // pred_check_branch
        %208 = sbr.rel (%p206) target = $region16
      $region15: #{basic_block_forward.1} parent=11 // pred_region
        _
      $region16: #{basic_block_forward.1} parent=11 // pred_fallthru
        _
      // Predicated region
      $region17: #{basic_block_forward.1} parent=11 // pred_check
        %p209 = pneg %p81
      $region18: #{basic_block_forward.1} parent=11 // pred_check_branch
        %211 = sbr.rel (%p209) target = $region20
      $region19: #{basic_block_forward.1} parent=11 // pred_region
        _
      $region20: #{basic_block_forward.1} parent=11 // pred_fallthru
        _
      // Predicated region
      $region21: #{basic_block_forward.1} parent=11 // pred_check
        %p212 = pneg %p102
      $region22: #{basic_block_forward.1} parent=11 // pred_check_branch
        %214 = sbr.rel (%p212) target = $region24
      $region23: #{basic_block_forward.1} parent=11 // pred_region
        _
      $region24: #{basic_block_forward.1} parent=11 // pred_fallthru
        _
      // Predicated region
      $region25: #{basic_block_forward.1} parent=11 // pred_check
        %p215 = pneg %p123
      $region26: #{basic_block_forward.1} parent=11 // pred_check_branch
        %217 = sbr.rel (%p215) target = $region28
      $region27: #{basic_block_forward.1} parent=11 // pred_region
        _
      $region28: #{basic_block_forward.1} parent=11 // pred_fallthru
        _
      // Predicated region
      $region29: #{basic_block_forward.1} parent=11 // pred_check
        %p218 = pneg %p144
      $region30: #{basic_block_forward.1} parent=11 // pred_check_branch
        %220 = sbr.rel (%p218) target = $region32
      $region31: #{basic_block_forward.1} parent=11 // pred_region
        _
      $region32: #{basic_block_forward.1} parent=11 // pred_fallthru
        _
      // Predicated region
      $region33: #{basic_block_forward.1} parent=11 // pred_check
        %p221 = pneg %p165
      $region34: #{basic_block_forward.1} parent=11 // pred_check_branch
        %223 = sbr.rel (%p221) target = $region36
      $region35: #{basic_block_forward.1} parent=11 // pred_region
        _
      $region36: #{basic_block_forward.1} parent=11 // pred_fallthru
        _
    $region12: #{basic_block_forward.1} parent=5 // pred_fallthru
      _
    %p224 = scmp.lt.s32.totalorder %s13, 2
    // Predicated region
    $region37: #{basic_block_forward.1} parent=5 // pred_check
      %p225 = pneg %p224
    $region38: #{basic_block_forward.1} parent=5 // pred_check_branch
      %227 = sbr.rel (%p225) target = $region40
    $region39: #{basic_block_forward.1} parent=5 // pred_region
      // Predicated region
      $region41: #{basic_block_forward.1} parent=39 // pred_check
        %p228 = pneg %p33
      $region42: #{basic_block_forward.1} parent=39 // pred_check_branch
        %230 = sbr.rel (%p228) target = $region44
      $region43: #{basic_block_forward.1} parent=39 // pred_region
        %p231 = scmp.lt.s32.totalorder %s13, 1
        %s232 = scalar_select %p231, %s13, 1
        %s233 = smul.addr %s232, 2
        %s234 = smul.addr %s233, 8
        %s235 = scalar_lea.vmem %s0, %s234
      $region44: #{basic_block_forward.1} parent=39 // pred_fallthru
        _
    $region40: #{basic_block_forward.1} parent=5 // pred_fallthru
      _
    %p236 = scmp.le.s32.totalorder 1, %s13
    %p237 = scmp.lt.s32.totalorder %s13, 3
    %p238 = pnand %p236, %p237
    %p239 = pneg %p238
    // Predicated region
    $region45: #{basic_block_forward.1} parent=5 // pred_check
      _
    $region46: #{basic_block_forward.1} parent=5 // pred_check_branch
      %241 = sbr.rel (%p238) target = $region48
    $region47: #{basic_block_forward.1} parent=5 // pred_region
      %s242 = ssub.s32 %s13, 1
      %p243 = scmp.lt.s32.totalorder %s18, 1
      %s244 = scalar_select %p243, %s18, 1
      %s245 = smul.addr %s244, 2
      %s246 = smul.addr %s245, 8
      %s247 = scalar_lea.vmem %s0, %s246
      %p248 = pneg %p39
      %p249 = pneg %p36
      %p250 = pneg %p60
      %p251 = pneg %p57
      %p252 = pneg %p81
      %p253 = pneg %p78
      %p254 = pneg %p102
      %p255 = pneg %p99
      %p256 = pneg %p123
      %p257 = pneg %p120
      %p258 = pneg %p144
      %p259 = pneg %p141
      %p260 = pneg %p165
      %p261 = pneg %p162
      %p262 = pneg %p191
      %p263 = pneg %p188
      %p264 = scmp.lt.s32.totalorder %s18, 1
      %s265 = scalar_select %p264, %s18, 1
      %s266 = smul.addr %s265, 2
      %s267 = smul.addr %s266, 8
      %s268 = scalar_lea.vmem %s7, %s267
      %p269 = scmp.lt.s32.totalorder %s18, 1
      %s270 = scalar_select %p269, %s18, 1
      %s271 = smul.addr %s270, 2
      %s272 = smul.addr %s271, 8
      %s273 = scalar_lea.vmem %s0, %s272
      %p274 = scmp.lt.s32.totalorder %s18, 1
      %s275 = scalar_select %p274, %s18, 1
      %s276 = smul.addr %s275, 2
      %s277 = smul.addr %s276, 8
      %s278 = scalar_lea.vmem %s7, %s277
      %v279 = vld [vmem:[%s273] sm:$0xff]
      %v280 = vld [vmem:[%s273 + $0x8] sm:$0xff]
      %vm283 = vcmask 1040384
      %v284 = vrot.slane %v279, 7
      %v285 = vrot.slane %v280, 7
      %v286 = vsel %vm283, %v284, %v285
      %v289 = vsel %vm283, 0.0, %v284
      %vm290 = vcmask 1046528
      %v291 = vrot.slane %v279, 1
      %v292 = vrot.slane %v280, 1
      %v293 = vsel %vm290, %v291, %v292
      %v296 = vsel %vm290, %v292, 0.0
      %v297 = vld [vmem:[%s1] sm:$0xff]
      %v298 = vld [vmem:[%s1 + $0x8] sm:$0xff]
      %v299 = vld [vmem:[%s1 + $0x10] sm:$0xff]
      %v300 = vld [vmem:[%s1 + $0x18] sm:$0xff]
      %v301 = vld [vmem:[%s1 + $0x20] sm:$0xff]
      %v302 = vld [vmem:[%s1 + $0x28] sm:$0xff]
      %v303 = vld [vmem:[%s1 + $0x30] sm:$0xff]
      %v304 = vld [vmem:[%s1 + $0x38] sm:$0xff]
      %v305 = vld [vmem:[%s1 + $0x40] sm:$0xff]
      %v306 = vld [vmem:[%s1 + $0x48] sm:$0xff]
      %v307 = vld [vmem:[%s1 + $0x50] sm:$0xff]
      %v308 = vld [vmem:[%s1 + $0x58] sm:$0xff]
      %v309 = vld [vmem:[%s1 + $0x60] sm:$0xff]
      %v310 = vld [vmem:[%s1 + $0x68] sm:$0xff]
      %v311 = vld [vmem:[%s1 + $0x70] sm:$0xff]
      %v312 = vld [vmem:[%s1 + $0x78] sm:$0xff]
      %s313 = scalar_lea.vmem %s1, 128
      %v314 = vld [vmem:[%s313] sm:$0xff]
      %v315 = vld [vmem:[%s313 + $0x8] sm:$0xff]
      %v316 = vld [vmem:[%s313 + $0x10] sm:$0xff]
      %v317 = vld [vmem:[%s313 + $0x18] sm:$0xff]
      %v318 = vld [vmem:[%s313 + $0x20] sm:$0xff]
      %v319 = vld [vmem:[%s313 + $0x28] sm:$0xff]
      %v320 = vld [vmem:[%s313 + $0x30] sm:$0xff]
      %v321 = vld [vmem:[%s313 + $0x38] sm:$0xff]
      %v322 = vld [vmem:[%s313 + $0x40] sm:$0xff]
      %v323 = vld [vmem:[%s313 + $0x48] sm:$0xff]
      %v324 = vld [vmem:[%s313 + $0x50] sm:$0xff]
      %v325 = vld [vmem:[%s313 + $0x58] sm:$0xff]
      %v326 = vld [vmem:[%s313 + $0x60] sm:$0xff]
      %v327 = vld [vmem:[%s313 + $0x68] sm:$0xff]
      %v328 = vld [vmem:[%s313 + $0x70] sm:$0xff]
      %v329 = vld [vmem:[%s313 + $0x78] sm:$0xff]
      %330 = vmatprep.subr.mxu0 0.0
      %331 = vmatpush1.msra.mxu0 %v329
      %332 = vmatprep.subr.mxu0 0.0
      %333 = vmatpush1.msra.mxu0 %v328
      %334 = vmatprep.subr.mxu0 0.0
      %335 = vmatpush1.msra.mxu0 %v327
      %336 = vmatprep.subr.mxu0 0.0
      %337 = vmatpush1.msra.mxu0 %v326
      %338 = vmatprep.subr.mxu0 0.0
      %339 = vmatpush1.msra.mxu0 %v325
      %340 = vmatprep.subr.mxu0 0.0
      %341 = vmatpush1.msra.mxu0 %v324
      %342 = vmatprep.subr.mxu0 0.0
      %343 = vmatpush1.msra.mxu0 %v323
      %344 = vmatprep.subr.mxu0 0.0
      %345 = vmatpush1.msra.mxu0 %v322
      %346 = vmatprep.subr.mxu0 0.0
      %347 = vmatpush1.msra.mxu0 %v321
      %348 = vmatprep.subr.mxu0 0.0
      %349 = vmatpush1.msra.mxu0 %v320
      %350 = vmatprep.subr.mxu0 0.0
      %351 = vmatpush1.msra.mxu0 %v319
      %352 = vmatprep.subr.mxu0 0.0
      %353 = vmatpush1.msra.mxu0 %v318
      %354 = vmatprep.subr.mxu0 0.0
      %355 = vmatpush1.msra.mxu0 %v317
      %356 = vmatprep.subr.mxu0 0.0
      %357 = vmatpush1.msra.mxu0 %v316
      %358 = vmatprep.subr.mxu0 0.0
      %359 = vmatpush1.msra.mxu0 %v315
      %360 = vmatprep.subr.mxu0 0.0
      %361 = vmatpush1.msra.mxu0 %v314
      %362 = vmatprep.subr.mxu0 0.0
      %363 = vmatpush2.msra.mxu0 0.0
      %364 = vmatprep.subr.mxu0 0.0
      %365 = vmatpush2.msra.mxu0 0.0
      %366 = vmatprep.subr.mxu0 0.0
      %367 = vmatpush2.msra.mxu0 0.0
      %368 = vmatprep.subr.mxu0 0.0
      %369 = vmatpush2.msra.mxu0 0.0
      %370 = vmatprep.subr.mxu0 0.0
      %371 = vmatpush2.msra.mxu0 0.0
      %372 = vmatprep.subr.mxu0 0.0
      %373 = vmatpush2.msra.mxu0 0.0
      %374 = vmatprep.subr.mxu0 0.0
      %375 = vmatpush2.msra.mxu0 0.0
      %376 = vmatprep.subr.mxu0 0.0
      %377 = vmatpush2.msra.mxu0 0.0
      %378 = vmatprep.subr.mxu0 0.0
      %379 = vmatpush2.msra.mxu0 0.0
      %380 = vmatprep.subr.mxu0 0.0
      %381 = vmatpush2.msra.mxu0 0.0
      %382 = vmatprep.subr.mxu0 0.0
      %383 = vmatpush2.msra.mxu0 0.0
      %384 = vmatprep.subr.mxu0 0.0
      %385 = vmatpush2.msra.mxu0 0.0
      %386 = vmatprep.subr.mxu0 0.0
      %387 = vmatpush2.msra.mxu0 0.0
      %388 = vmatprep.subr.mxu0 0.0
      %389 = vmatpush2.msra.mxu0 0.0
      %390 = vmatprep.subr.mxu0 0.0
      %391 = vmatpush2.msra.mxu0 0.0
      %392 = vmatprep.subr.mxu0 0.0
      %393 = vmatpush2.msra.mxu0 0.0
      %394 = vmatprep.mubr.f32.mxu0 0.0
      %395 = vmatmul.mubr.f32.gmra.mxu0 %v279
      %v396 = vpop.f32.mrf.mxu0
      %v397 = vadd.f32 0.0, %v396
      %v398 = vpop.f32.mrf.mxu0
      %399 = vmatprep.mubr.f32.mxu0 0.0
      %400 = vmatmul.mubr.f32.gmra.mxu0 %v280
      %v401 = vpop.f32.mrf.mxu0
      %v402 = vadd.f32 0.0, %v401
      %v403 = vpop.f32.mrf.mxu0
      %404 = vdwg.mxu0
      %405 = vmatprep.subr.mxu0 0.0
      %406 = vmatpush1.msra.mxu0 %v312
      %407 = vmatprep.subr.mxu0 0.0
      %408 = vmatpush1.msra.mxu0 %v311
      %409 = vmatprep.subr.mxu0 0.0
      %410 = vmatpush1.msra.mxu0 %v310
      %411 = vmatprep.subr.mxu0 0.0
      %412 = vmatpush1.msra.mxu0 %v309
      %413 = vmatprep.subr.mxu0 0.0
      %414 = vmatpush1.msra.mxu0 %v308
      %415 = vmatprep.subr.mxu0 0.0
      %416 = vmatpush1.msra.mxu0 %v307
      %417 = vmatprep.subr.mxu0 0.0
      %418 = vmatpush1.msra.mxu0 %v306
      %419 = vmatprep.subr.mxu0 0.0
      %420 = vmatpush1.msra.mxu0 %v305
      %421 = vmatprep.subr.mxu0 0.0
      %422 = vmatpush1.msra.mxu0 %v304
      %423 = vmatprep.subr.mxu0 0.0
      %424 = vmatpush1.msra.mxu0 %v303
      %425 = vmatprep.subr.mxu0 0.0
      %426 = vmatpush1.msra.mxu0 %v302
      %427 = vmatprep.subr.mxu0 0.0
      %428 = vmatpush1.msra.mxu0 %v301
      %429 = vmatprep.subr.mxu0 0.0
      %430 = vmatpush1.msra.mxu0 %v300
      %431 = vmatprep.subr.mxu0 0.0
      %432 = vmatpush1.msra.mxu0 %v299
      %433 = vmatprep.subr.mxu0 0.0
      %434 = vmatpush1.msra.mxu0 %v298
      %435 = vmatprep.subr.mxu0 0.0
      %436 = vmatpush1.msra.mxu0 %v297
      %437 = vmatprep.subr.mxu0 0.0
      %438 = vmatpush2.msra.mxu0 0.0
      %439 = vmatprep.subr.mxu0 0.0
      %440 = vmatpush2.msra.mxu0 0.0
      %441 = vmatprep.subr.mxu0 0.0
      %442 = vmatpush2.msra.mxu0 0.0
      %443 = vmatprep.subr.mxu0 0.0
      %444 = vmatpush2.msra.mxu0 0.0
      %445 = vmatprep.subr.mxu0 0.0
      %446 = vmatpush2.msra.mxu0 0.0
      %447 = vmatprep.subr.mxu0 0.0
      %448 = vmatpush2.msra.mxu0 0.0
      %449 = vmatprep.subr.mxu0 0.0
      %450 = vmatpush2.msra.mxu0 0.0
      %451 = vmatprep.subr.mxu0 0.0
      %452 = vmatpush2.msra.mxu0 0.0
      %453 = vmatprep.subr.mxu0 0.0
      %454 = vmatpush2.msra.mxu0 0.0
      %455 = vmatprep.subr.mxu0 0.0
      %456 = vmatpush2.msra.mxu0 0.0
      %457 = vmatprep.subr.mxu0 0.0
      %458 = vmatpush2.msra.mxu0 0.0
      %459 = vmatprep.subr.mxu0 0.0
      %460 = vmatpush2.msra.mxu0 0.0
      %461 = vmatprep.subr.mxu0 0.0
      %462 = vmatpush2.msra.mxu0 0.0
      %463 = vmatprep.subr.mxu0 0.0
      %464 = vmatpush2.msra.mxu0 0.0
      %465 = vmatprep.subr.mxu0 0.0
      %466 = vmatpush2.msra.mxu0 0.0
      %467 = vmatprep.subr.mxu0 0.0
      %468 = vmatpush2.msra.mxu0 0.0
      %469 = vmatprep.mubr.f32.mxu0 0.0
      %470 = vmatmul.mubr.f32.gmra.mxu0 %v289
      %v471 = vpop.f32.mrf.mxu0
      %v472 = vadd.f32 %v397, %v471
      %v473 = vpop.f32.mrf.mxu0
      %474 = vmatprep.mubr.f32.mxu0 0.0
      %475 = vmatmul.mubr.f32.gmra.mxu0 %v286
      %v476 = vpop.f32.mrf.mxu0
      %v477 = vadd.f32 %v402, %v476
      %v478 = vpop.f32.mrf.mxu0
      %479 = vdwg.mxu0
      %s480 = scalar_lea.vmem %s1, 256
      %v481 = vld [vmem:[%s480] sm:$0xff]
      %v482 = vld [vmem:[%s480 + $0x8] sm:$0xff]
      %v483 = vld [vmem:[%s480 + $0x10] sm:$0xff]
      %v484 = vld [vmem:[%s480 + $0x18] sm:$0xff]
      %v485 = vld [vmem:[%s480 + $0x20] sm:$0xff]
      %v486 = vld [vmem:[%s480 + $0x28] sm:$0xff]
      %v487 = vld [vmem:[%s480 + $0x30] sm:$0xff]
      %v488 = vld [vmem:[%s480 + $0x38] sm:$0xff]
      %v489 = vld [vmem:[%s480 + $0x40] sm:$0xff]
      %v490 = vld [vmem:[%s480 + $0x48] sm:$0xff]
      %v491 = vld [vmem:[%s480 + $0x50] sm:$0xff]
      %v492 = vld [vmem:[%s480 + $0x58] sm:$0xff]
      %v493 = vld [vmem:[%s480 + $0x60] sm:$0xff]
      %v494 = vld [vmem:[%s480 + $0x68] sm:$0xff]
      %v495 = vld [vmem:[%s480 + $0x70] sm:$0xff]
      %v496 = vld [vmem:[%s480 + $0x78] sm:$0xff]
      %497 = vmatprep.subr.mxu0 0.0
      %498 = vmatpush1.msra.mxu0 %v496
      %499 = vmatprep.subr.mxu0 0.0
      %500 = vmatpush1.msra.mxu0 %v495
      %501 = vmatprep.subr.mxu0 0.0
      %502 = vmatpush1.msra.mxu0 %v494
      %503 = vmatprep.subr.mxu0 0.0
      %504 = vmatpush1.msra.mxu0 %v493
      %505 = vmatprep.subr.mxu0 0.0
      %506 = vmatpush1.msra.mxu0 %v492
      %507 = vmatprep.subr.mxu0 0.0
      %508 = vmatpush1.msra.mxu0 %v491
      %509 = vmatprep.subr.mxu0 0.0
      %510 = vmatpush1.msra.mxu0 %v490
      %511 = vmatprep.subr.mxu0 0.0
      %512 = vmatpush1.msra.mxu0 %v489
      %513 = vmatprep.subr.mxu0 0.0
      %514 = vmatpush1.msra.mxu0 %v488
      %515 = vmatprep.subr.mxu0 0.0
      %516 = vmatpush1.msra.mxu0 %v487
      %517 = vmatprep.subr.mxu0 0.0
      %518 = vmatpush1.msra.mxu0 %v486
      %519 = vmatprep.subr.mxu0 0.0
      %520 = vmatpush1.msra.mxu0 %v485
      %521 = vmatprep.subr.mxu0 0.0
      %522 = vmatpush1.msra.mxu0 %v484
      %523 = vmatprep.subr.mxu0 0.0
      %524 = vmatpush1.msra.mxu0 %v483
      %525 = vmatprep.subr.mxu0 0.0
      %526 = vmatpush1.msra.mxu0 %v482
      %527 = vmatprep.subr.mxu0 0.0
      %528 = vmatpush1.msra.mxu0 %v481
      %529 = vmatprep.subr.mxu0 0.0
      %530 = vmatpush2.msra.mxu0 0.0
      %531 = vmatprep.subr.mxu0 0.0
      %532 = vmatpush2.msra.mxu0 0.0
      %533 = vmatprep.subr.mxu0 0.0
      %534 = vmatpush2.msra.mxu0 0.0
      %535 = vmatprep.subr.mxu0 0.0
      %536 = vmatpush2.msra.mxu0 0.0
      %537 = vmatprep.subr.mxu0 0.0
      %538 = vmatpush2.msra.mxu0 0.0
      %539 = vmatprep.subr.mxu0 0.0
      %540 = vmatpush2.msra.mxu0 0.0
      %541 = vmatprep.subr.mxu0 0.0
      %542 = vmatpush2.msra.mxu0 0.0
      %543 = vmatprep.subr.mxu0 0.0
      %544 = vmatpush2.msra.mxu0 0.0
      %545 = vmatprep.subr.mxu0 0.0
      %546 = vmatpush2.msra.mxu0 0.0
      %547 = vmatprep.subr.mxu0 0.0
      %548 = vmatpush2.msra.mxu0 0.0
      %549 = vmatprep.subr.mxu0 0.0
      %550 = vmatpush2.msra.mxu0 0.0
      %551 = vmatprep.subr.mxu0 0.0
      %552 = vmatpush2.msra.mxu0 0.0
      %553 = vmatprep.subr.mxu0 0.0
      %554 = vmatpush2.msra.mxu0 0.0
      %555 = vmatprep.subr.mxu0 0.0
      %556 = vmatpush2.msra.mxu0 0.0
      %557 = vmatprep.subr.mxu0 0.0
      %558 = vmatpush2.msra.mxu0 0.0
      %559 = vmatprep.subr.mxu0 0.0
      %560 = vmatpush2.msra.mxu0 0.0
      %561 = vmatprep.mubr.f32.mxu0 0.0
      %562 = vmatmul.mubr.f32.gmra.mxu0 %v293
      %v563 = vpop.f32.mrf.mxu0
      %v564 = vadd.f32 0.0, %v563
      %v565 = vpop.f32.mrf.mxu0
      %566 = vmatprep.mubr.f32.mxu0 0.0
      %567 = vmatmul.mubr.f32.gmra.mxu0 %v296
      %v568 = vpop.f32.mrf.mxu0
      %v569 = vadd.f32 0.0, %v568
      %v570 = vpop.f32.mrf.mxu0
      %571 = vdwg.mxu0
      %v572 = vadd.f32 %v472, %v564
      %v573 = vadd.f32 %v477, %v569
      %v574 = vld [vmem:[%s2] sm:$0x1]
      %v576 = vlaneseq
      %v577 = vshrl.u32 %v576, 7
      %v578 = vsub.s32 0, %v577
      %v579 = vrot.slane %v574, %v578
      %v581 = vmul.f32 %v572, %v579
      %v582 = vmul.f32 %v573, %v579
      %v583 = vld [vmem:[%s3] sm:$0x1]
      %v585 = vlaneseq
      %v586 = vshrl.u32 %v585, 7
      %v587 = vsub.s32 0, %v586
      %v588 = vrot.slane %v583, %v587
      %v590 = vadd.f32 %v581, %v588
      %v591 = vadd.f32 %v582, %v588
      %v592 = vmax.f32 %v590, 0.0
      %v593 = vmax.f32 %v591, 0.0
      %v596 = vrot.slane %v592, 7
      %v597 = vrot.slane %v593, 7
      %v598 = vsel %vm283, %v596, %v597
      %v601 = vsel %vm283, 0.0, %v596
      %v602 = vrot.slane %v592, 1
      %v603 = vrot.slane %v593, 1
      %v604 = vsel %vm290, %v602, %v603
      %v607 = vsel %vm290, %v603, 0.0
      %v608 = vld [vmem:[%s4] sm:$0xff]
      %v609 = vld [vmem:[%s4 + $0x8] sm:$0xff]
      %v610 = vld [vmem:[%s4 + $0x10] sm:$0xff]
      %v611 = vld [vmem:[%s4 + $0x18] sm:$0xff]
      %v612 = vld [vmem:[%s4 + $0x20] sm:$0xff]
      %v613 = vld [vmem:[%s4 + $0x28] sm:$0xff]
      %v614 = vld [vmem:[%s4 + $0x30] sm:$0xff]
      %v615 = vld [vmem:[%s4 + $0x38] sm:$0xff]
      %v616 = vld [vmem:[%s4 + $0x40] sm:$0xff]
      %v617 = vld [vmem:[%s4 + $0x48] sm:$0xff]
      %v618 = vld [vmem:[%s4 + $0x50] sm:$0xff]
      %v619 = vld [vmem:[%s4 + $0x58] sm:$0xff]
      %v620 = vld [vmem:[%s4 + $0x60] sm:$0xff]
      %v621 = vld [vmem:[%s4 + $0x68] sm:$0xff]
      %v622 = vld [vmem:[%s4 + $0x70] sm:$0xff]
      %v623 = vld [vmem:[%s4 + $0x78] sm:$0xff]
      %s624 = scalar_lea.vmem %s4, 128
      %v625 = vld [vmem:[%s624] sm:$0xff]
      %v626 = vld [vmem:[%s624 + $0x8] sm:$0xff]
      %v627 = vld [vmem:[%s624 + $0x10] sm:$0xff]
      %v628 = vld [vmem:[%s624 + $0x18] sm:$0xff]
      %v629 = vld [vmem:[%s624 + $0x20] sm:$0xff]
      %v630 = vld [vmem:[%s624 + $0x28] sm:$0xff]
      %v631 = vld [vmem:[%s624 + $0x30] sm:$0xff]
      %v632 = vld [vmem:[%s624 + $0x38] sm:$0xff]
      %v633 = vld [vmem:[%s624 + $0x40] sm:$0xff]
      %v634 = vld [vmem:[%s624 + $0x48] sm:$0xff]
      %v635 = vld [vmem:[%s624 + $0x50] sm:$0xff]
      %v636 = vld [vmem:[%s624 + $0x58] sm:$0xff]
      %v637 = vld [vmem:[%s624 + $0x60] sm:$0xff]
      %v638 = vld [vmem:[%s624 + $0x68] sm:$0xff]
      %v639 = vld [vmem:[%s624 + $0x70] sm:$0xff]
      %v640 = vld [vmem:[%s624 + $0x78] sm:$0xff]
      %641 = vmatprep.subr.mxu0 0.0
      %642 = vmatpush1.msra.mxu0 %v640
      %643 = vmatprep.subr.mxu0 0.0
      %644 = vmatpush1.msra.mxu0 %v639
      %645 = vmatprep.subr.mxu0 0.0
      %646 = vmatpush1.msra.mxu0 %v638
      %647 = vmatprep.subr.mxu0 0.0
      %648 = vmatpush1.msra.mxu0 %v637
      %649 = vmatprep.subr.mxu0 0.0
      %650 = vmatpush1.msra.mxu0 %v636
      %651 = vmatprep.subr.mxu0 0.0
      %652 = vmatpush1.msra.mxu0 %v635
      %653 = vmatprep.subr.mxu0 0.0
      %654 = vmatpush1.msra.mxu0 %v634
      %655 = vmatprep.subr.mxu0 0.0
      %656 = vmatpush1.msra.mxu0 %v633
      %657 = vmatprep.subr.mxu0 0.0
      %658 = vmatpush1.msra.mxu0 %v632
      %659 = vmatprep.subr.mxu0 0.0
      %660 = vmatpush1.msra.mxu0 %v631
      %661 = vmatprep.subr.mxu0 0.0
      %662 = vmatpush1.msra.mxu0 %v630
      %663 = vmatprep.subr.mxu0 0.0
      %664 = vmatpush1.msra.mxu0 %v629
      %665 = vmatprep.subr.mxu0 0.0
      %666 = vmatpush1.msra.mxu0 %v628
      %667 = vmatprep.subr.mxu0 0.0
      %668 = vmatpush1.msra.mxu0 %v627
      %669 = vmatprep.subr.mxu0 0.0
      %670 = vmatpush1.msra.mxu0 %v626
      %671 = vmatprep.subr.mxu0 0.0
      %672 = vmatpush1.msra.mxu0 %v625
      %673 = vmatprep.subr.mxu0 0.0
      %674 = vmatpush2.msra.mxu0 0.0
      %675 = vmatprep.subr.mxu0 0.0
      %676 = vmatpush2.msra.mxu0 0.0
      %677 = vmatprep.subr.mxu0 0.0
      %678 = vmatpush2.msra.mxu0 0.0
      %679 = vmatprep.subr.mxu0 0.0
      %680 = vmatpush2.msra.mxu0 0.0
      %681 = vmatprep.subr.mxu0 0.0
      %682 = vmatpush2.msra.mxu0 0.0
      %683 = vmatprep.subr.mxu0 0.0
      %684 = vmatpush2.msra.mxu0 0.0
      %685 = vmatprep.subr.mxu0 0.0
      %686 = vmatpush2.msra.mxu0 0.0
      %687 = vmatprep.subr.mxu0 0.0
      %688 = vmatpush2.msra.mxu0 0.0
      %689 = vmatprep.subr.mxu0 0.0
      %690 = vmatpush2.msra.mxu0 0.0
      %691 = vmatprep.subr.mxu0 0.0
      %692 = vmatpush2.msra.mxu0 0.0
      %693 = vmatprep.subr.mxu0 0.0
      %694 = vmatpush2.msra.mxu0 0.0
      %695 = vmatprep.subr.mxu0 0.0
      %696 = vmatpush2.msra.mxu0 0.0
      %697 = vmatprep.subr.mxu0 0.0
      %698 = vmatpush2.msra.mxu0 0.0
      %699 = vmatprep.subr.mxu0 0.0
      %700 = vmatpush2.msra.mxu0 0.0
      %701 = vmatprep.subr.mxu0 0.0
      %702 = vmatpush2.msra.mxu0 0.0
      %703 = vmatprep.subr.mxu0 0.0
      %704 = vmatpush2.msra.mxu0 0.0
      %705 = vmatprep.mubr.f32.mxu0 0.0
      %706 = vmatmul.mubr.f32.gmra.mxu0 %v592
      %v707 = vpop.f32.mrf.mxu0
      %v708 = vadd.f32 0.0, %v707
      %v709 = vpop.f32.mrf.mxu0
      %710 = vmatprep.mubr.f32.mxu0 0.0
      %711 = vmatmul.mubr.f32.gmra.mxu0 %v593
      %v712 = vpop.f32.mrf.mxu0
      %v713 = vadd.f32 0.0, %v712
      %v714 = vpop.f32.mrf.mxu0
      %715 = vdwg.mxu0
      %716 = vmatprep.subr.mxu0 0.0
      %717 = vmatpush1.msra.mxu0 %v623
      %718 = vmatprep.subr.mxu0 0.0
      %719 = vmatpush1.msra.mxu0 %v622
      %720 = vmatprep.subr.mxu0 0.0
      %721 = vmatpush1.msra.mxu0 %v621
      %722 = vmatprep.subr.mxu0 0.0
      %723 = vmatpush1.msra.mxu0 %v620
      %724 = vmatprep.subr.mxu0 0.0
      %725 = vmatpush1.msra.mxu0 %v619
      %726 = vmatprep.subr.mxu0 0.0
      %727 = vmatpush1.msra.mxu0 %v618
      %728 = vmatprep.subr.mxu0 0.0
      %729 = vmatpush1.msra.mxu0 %v617
      %730 = vmatprep.subr.mxu0 0.0
      %731 = vmatpush1.msra.mxu0 %v616
      %732 = vmatprep.subr.mxu0 0.0
      %733 = vmatpush1.msra.mxu0 %v615
      %734 = vmatprep.subr.mxu0 0.0
      %735 = vmatpush1.msra.mxu0 %v614
      %736 = vmatprep.subr.mxu0 0.0
      %737 = vmatpush1.msra.mxu0 %v613
      %738 = vmatprep.subr.mxu0 0.0
      %739 = vmatpush1.msra.mxu0 %v612
      %740 = vmatprep.subr.mxu0 0.0
      %741 = vmatpush1.msra.mxu0 %v611
      %742 = vmatprep.subr.mxu0 0.0
      %743 = vmatpush1.msra.mxu0 %v610
      %744 = vmatprep.subr.mxu0 0.0
      %745 = vmatpush1.msra.mxu0 %v609
      %746 = vmatprep.subr.mxu0 0.0
      %747 = vmatpush1.msra.mxu0 %v608
      %748 = vmatprep.subr.mxu0 0.0
      %749 = vmatpush2.msra.mxu0 0.0
      %750 = vmatprep.subr.mxu0 0.0
      %751 = vmatpush2.msra.mxu0 0.0
      %752 = vmatprep.subr.mxu0 0.0
      %753 = vmatpush2.msra.mxu0 0.0
      %754 = vmatprep.subr.mxu0 0.0
      %755 = vmatpush2.msra.mxu0 0.0
      %756 = vmatprep.subr.mxu0 0.0
      %757 = vmatpush2.msra.mxu0 0.0
      %758 = vmatprep.subr.mxu0 0.0
      %759 = vmatpush2.msra.mxu0 0.0
      %760 = vmatprep.subr.mxu0 0.0
      %761 = vmatpush2.msra.mxu0 0.0
      %762 = vmatprep.subr.mxu0 0.0
      %763 = vmatpush2.msra.mxu0 0.0
      %764 = vmatprep.subr.mxu0 0.0
      %765 = vmatpush2.msra.mxu0 0.0
      %766 = vmatprep.subr.mxu0 0.0
      %767 = vmatpush2.msra.mxu0 0.0
      %768 = vmatprep.subr.mxu0 0.0
      %769 = vmatpush2.msra.mxu0 0.0
      %770 = vmatprep.subr.mxu0 0.0
      %771 = vmatpush2.msra.mxu0 0.0
      %772 = vmatprep.subr.mxu0 0.0
      %773 = vmatpush2.msra.mxu0 0.0
      %774 = vmatprep.subr.mxu0 0.0
      %775 = vmatpush2.msra.mxu0 0.0
      %776 = vmatprep.subr.mxu0 0.0
      %777 = vmatpush2.msra.mxu0 0.0
      %778 = vmatprep.subr.mxu0 0.0
      %779 = vmatpush2.msra.mxu0 0.0
      %780 = vmatprep.mubr.f32.mxu0 0.0
      %781 = vmatmul.mubr.f32.gmra.mxu0 %v601
      %v782 = vpop.f32.mrf.mxu0
      %v783 = vadd.f32 %v708, %v782
      %v784 = vpop.f32.mrf.mxu0
      %785 = vmatprep.mubr.f32.mxu0 0.0
      %786 = vmatmul.mubr.f32.gmra.mxu0 %v598
      %v787 = vpop.f32.mrf.mxu0
      %v788 = vadd.f32 %v713, %v787
      %v789 = vpop.f32.mrf.mxu0
      %790 = vdwg.mxu0
      %s791 = scalar_lea.vmem %s4, 256
      %v792 = vld [vmem:[%s791] sm:$0xff]
      %v793 = vld [vmem:[%s791 + $0x8] sm:$0xff]
      %v794 = vld [vmem:[%s791 + $0x10] sm:$0xff]
      %v795 = vld [vmem:[%s791 + $0x18] sm:$0xff]
      %v796 = vld [vmem:[%s791 + $0x20] sm:$0xff]
      %v797 = vld [vmem:[%s791 + $0x28] sm:$0xff]
      %v798 = vld [vmem:[%s791 + $0x30] sm:$0xff]
      %v799 = vld [vmem:[%s791 + $0x38] sm:$0xff]
      %v800 = vld [vmem:[%s791 + $0x40] sm:$0xff]
      %v801 = vld [vmem:[%s791 + $0x48] sm:$0xff]
      %v802 = vld [vmem:[%s791 + $0x50] sm:$0xff]
      %v803 = vld [vmem:[%s791 + $0x58] sm:$0xff]
      %v804 = vld [vmem:[%s791 + $0x60] sm:$0xff]
      %v805 = vld [vmem:[%s791 + $0x68] sm:$0xff]
      %v806 = vld [vmem:[%s791 + $0x70] sm:$0xff]
      %v807 = vld [vmem:[%s791 + $0x78] sm:$0xff]
      %808 = vmatprep.subr.mxu0 0.0
      %809 = vmatpush1.msra.mxu0 %v807
      %810 = vmatprep.subr.mxu0 0.0
      %811 = vmatpush1.msra.mxu0 %v806
      %812 = vmatprep.subr.mxu0 0.0
      %813 = vmatpush1.msra.mxu0 %v805
      %814 = vmatprep.subr.mxu0 0.0
      %815 = vmatpush1.msra.mxu0 %v804
      %816 = vmatprep.subr.mxu0 0.0
      %817 = vmatpush1.msra.mxu0 %v803
      %818 = vmatprep.subr.mxu0 0.0
      %819 = vmatpush1.msra.mxu0 %v802
      %820 = vmatprep.subr.mxu0 0.0
      %821 = vmatpush1.msra.mxu0 %v801
      %822 = vmatprep.subr.mxu0 0.0
      %823 = vmatpush1.msra.mxu0 %v800
      %824 = vmatprep.subr.mxu0 0.0
      %825 = vmatpush1.msra.mxu0 %v799
      %826 = vmatprep.subr.mxu0 0.0
      %827 = vmatpush1.msra.mxu0 %v798
      %828 = vmatprep.subr.mxu0 0.0
      %829 = vmatpush1.msra.mxu0 %v797
      %830 = vmatprep.subr.mxu0 0.0
      %831 = vmatpush1.msra.mxu0 %v796
      %832 = vmatprep.subr.mxu0 0.0
      %833 = vmatpush1.msra.mxu0 %v795
      %834 = vmatprep.subr.mxu0 0.0
      %835 = vmatpush1.msra.mxu0 %v794
      %836 = vmatprep.subr.mxu0 0.0
      %837 = vmatpush1.msra.mxu0 %v793
      %838 = vmatprep.subr.mxu0 0.0
      %839 = vmatpush1.msra.mxu0 %v792
      %840 = vmatprep.subr.mxu0 0.0
      %841 = vmatpush2.msra.mxu0 0.0
      %842 = vmatprep.subr.mxu0 0.0
      %843 = vmatpush2.msra.mxu0 0.0
      %844 = vmatprep.subr.mxu0 0.0
      %845 = vmatpush2.msra.mxu0 0.0
      %846 = vmatprep.subr.mxu0 0.0
      %847 = vmatpush2.msra.mxu0 0.0
      %848 = vmatprep.subr.mxu0 0.0
      %849 = vmatpush2.msra.mxu0 0.0
      %850 = vmatprep.subr.mxu0 0.0
      %851 = vmatpush2.msra.mxu0 0.0
      %852 = vmatprep.subr.mxu0 0.0
      %853 = vmatpush2.msra.mxu0 0.0
      %854 = vmatprep.subr.mxu0 0.0
      %855 = vmatpush2.msra.mxu0 0.0
      %856 = vmatprep.subr.mxu0 0.0
      %857 = vmatpush2.msra.mxu0 0.0
      %858 = vmatprep.subr.mxu0 0.0
      %859 = vmatpush2.msra.mxu0 0.0
      %860 = vmatprep.subr.mxu0 0.0
      %861 = vmatpush2.msra.mxu0 0.0
      %862 = vmatprep.subr.mxu0 0.0
      %863 = vmatpush2.msra.mxu0 0.0
      %864 = vmatprep.subr.mxu0 0.0
      %865 = vmatpush2.msra.mxu0 0.0
      %866 = vmatprep.subr.mxu0 0.0
      %867 = vmatpush2.msra.mxu0 0.0
      %868 = vmatprep.subr.mxu0 0.0
      %869 = vmatpush2.msra.mxu0 0.0
      %870 = vmatprep.subr.mxu0 0.0
      %871 = vmatpush2.msra.mxu0 0.0
      %872 = vmatprep.mubr.f32.mxu0 0.0
      %873 = vmatmul.mubr.f32.gmra.mxu0 %v604
      %v874 = vpop.f32.mrf.mxu0
      %v875 = vadd.f32 0.0, %v874
      %v876 = vpop.f32.mrf.mxu0
      %877 = vmatprep.mubr.f32.mxu0 0.0
      %878 = vmatmul.mubr.f32.gmra.mxu0 %v607
      %v879 = vpop.f32.mrf.mxu0
      %v880 = vadd.f32 0.0, %v879
      %v881 = vpop.f32.mrf.mxu0
      %882 = vdwg.mxu0
      %v883 = vadd.f32 %v783, %v875
      %v884 = vadd.f32 %v788, %v880
      %v885 = vld [vmem:[%s5] sm:$0x1]
      %v887 = vlaneseq
      %v888 = vshrl.u32 %v887, 7
      %v889 = vsub.s32 0, %v888
      %v890 = vrot.slane %v885, %v889
      %v892 = vmul.f32 %v883, %v890
      %v893 = vmul.f32 %v884, %v890
      %v894 = vld [vmem:[%s6] sm:$0x1]
      %v896 = vlaneseq
      %v897 = vshrl.u32 %v896, 7
      %v898 = vsub.s32 0, %v897
      %v899 = vrot.slane %v894, %v898
      %v901 = vadd.f32 %v892, %v899
      %v902 = vadd.f32 %v893, %v899
      %v903 = vadd.f32 %v901, %v279
      %v904 = vadd.f32 %v902, %v280
      %v905 = vmax.f32 %v903, 0.0
      %v906 = vmax.f32 %v904, 0.0
      %907 = vst [vmem:[%s278] sm:$0xff] %v905
      %908 = vst [vmem:[%s278 + $0x8] sm:$0xff] %v906
      %p909 = scmp.lt.s32.totalorder %s18, 1
      %s910 = scalar_select %p909, %s18, 1
      %s911 = smul.addr %s910, 2
      %s912 = smul.addr %s911, 8
      %s913 = scalar_lea.vmem %s7, %s912
      // Predicated region
      $region49: #{basic_block_forward.1} parent=47 // pred_check
        %p914 = pneg %p188
      $region50: #{basic_block_forward.1} parent=47 // pred_check_branch
        %916 = sbr.rel (%p914) target = $region52
      $region51: #{basic_block_forward.1} parent=47 // pred_region
        _
      $region52: #{basic_block_forward.1} parent=47 // pred_fallthru
        _
    $region48: #{basic_block_forward.1} parent=5 // pred_fallthru
      _
    %p917 = scmp.le.s32.totalorder 2, %s13
    // Predicated region
    $region53: #{basic_block_forward.1} parent=5 // pred_check
      %p918 = pneg %p917
    $region54: #{basic_block_forward.1} parent=5 // pred_check_branch
      %920 = sbr.rel (%p918) target = $region56
    $region55: #{basic_block_forward.1} parent=5 // pred_region
      %s921 = ssub.s32 %s13, 2
      // Predicated region
      $region57: #{basic_block_forward.1} parent=55 // pred_check
        %p922 = pneg %p194
      $region58: #{basic_block_forward.1} parent=55 // pred_check_branch
        %924 = sbr.rel (%p922) target = $region60
      $region59: #{basic_block_forward.1} parent=55 // pred_region
        %p925 = scmp.lt.s32.totalorder %s19, 1
        %s926 = scalar_select %p925, %s19, 1
        %s927 = smul.addr %s926, 2
        %s928 = smul.addr %s927, 8
        %s929 = scalar_lea.vmem %s7, %s928
      $region60: #{basic_block_forward.1} parent=55 // pred_fallthru
        _
    $region56: #{basic_block_forward.1} parent=5 // pred_fallthru
      _
  $region6: #{basic_block_forward.1} parent=0 // loop_footer
    %s17 = sadd.s32 1, %s13
  $region7: #{basic_block_forward.1} parent=0 // loop_footer_branch
    %12 = sbr.rel target = $region3
  $region8: #{basic_block_forward.1} parent=0 // loop_exit
    _

</llo_original>
